<compile_context>
chip_gen: v6e
topology: v6e:2x2x1
jax: 0.10.0
libtpu: 0.0.40
codegen_flags: <defaults>
</compile_context>

<pallas_src>
import jax
import jax.numpy as jnp
from jax.experimental import pallas as pl
from jax.experimental.pallas import tpu as pltpu


def _sigmoid_kernel(x_ref, o_ref):
    # sigmoid(x) == 0.5 * (tanh(0.5 * x) + 1): one EUP op (tanh) per element,
    # mul/add go to the VPU (separate bundle slots -> effectively free).
    x = x_ref[...].astype(jnp.float32)
    o_ref[...] = (0.5 * jnp.tanh(0.5 * x) + 0.5).astype(o_ref.dtype)


# Candidate slab widths (multiples of 128), widest first for lane-dense stores.
_LANE_CANDIDATES = (2048, 1024, 512, 256, 128)
# Target block size in elements (f32 -> 2 MiB per block, bf16 -> 1 MiB).
_TARGET_BLOCK_ELEMS = 512 * 1024


def hedy_forward(x: jax.Array, *, min_pallas_bytes: int = 512 * 1024) -> jax.Array:
    """Elementwise sigmoid via a Pallas TPU kernel.

    x: array of any shape (e.g. NCHW [B, C, H, W]).
    min_pallas_bytes: below this size fall back to plain jax.nn.sigmoid
        (kernel-launch / dispatch overhead dominates for tiny tensors).
    """
    orig_shape = x.shape
    orig_dtype = x.dtype
    n = x.size

    # Fast path 1: tiny tensors -> XLA's fused elementwise sigmoid wins.
    if n * x.dtype.itemsize < min_pallas_bytes:
        return jax.nn.sigmoid(x)

    # Fast path 2: ragged element counts.  Padding to a multiple of 128 and
    # re-slicing afterwards each copy the *whole* array (~3x HBM traffic),
    # which is strictly worse than XLA's fused, already memory-bound sigmoid.
    if n % 128 != 0:
        return jax.nn.sigmoid(x)

    # ---- Lane-dense slab (rows, lane_c); reshape is zero-copy metadata. ----
    lane_c = next(c for c in _LANE_CANDIDATES if n % c == 0)
    rows = n // lane_c
    slab = x.reshape(rows, lane_c)

    # ---- Big, sublane-aligned row block (~_TARGET_BLOCK_ELEMS elements). ----
    # Multiple of 32 rows keeps the tile legal for f32/bf16/int8/fp8 packing.
    target_rows = max(32, ((_TARGET_BLOCK_ELEMS // lane_c) // 32) * 32)
    block_rows = rows if rows <= target_rows else target_rows
    num_blocks = pl.cdiv(rows, block_rows)  # partial last block masked by Pallas

    out = pl.pallas_call(
        _sigmoid_kernel,
        out_shape=jax.ShapeDtypeStruct((rows, lane_c), orig_dtype),
        grid_spec=pltpu.PrefetchScalarGridSpec(
            num_scalar_prefetch=0,
            grid=(num_blocks,),
            in_specs=[pl.BlockSpec((block_rows, lane_c), lambda i: (i, 0))],
            out_specs=pl.BlockSpec((block_rows, lane_c), lambda i: (i, 0)),
        ),
        compiler_params=pltpu.CompilerParams(
            # Independent row blocks -> shard across both TensorCores on v7x.
            dimension_semantics=("parallel",),
        ),
    )(slab)

    return out.reshape(orig_shape)


if __name__ == "__main__":
    k0, k1 = jax.random.split(jax.random.PRNGKey(0))

    # Small NCHW input consistent with a conv-style module input.
    x = jax.random.normal(k0, (2, 4, 16, 16), dtype=jnp.float32)

    # Force the Pallas path even for the tiny demo tensor.
    y = hedy_forward(x, min_pallas_bytes=0)
    jax.block_until_ready(y)
    y_ref = jax.nn.sigmoid(x)
    assert y.shape == x.shape and y.dtype == x.dtype
    assert jnp.allclose(y, y_ref, atol=1e-5, rtol=1e-5)

    # Default path on the tiny tensor takes the fused-XLA fast path.
    y_fast = hedy_forward(x)
    assert jnp.allclose(y_fast, y_ref, atol=1e-6, rtol=1e-6)

    # Larger jit-compiled run exercising the multi-block, 2 MiB-tile pipeline
    # (8*16*128*128 elems -> slab (1024, 2048), 4 blocks of (256, 2048)).
    x2 = jax.random.normal(k1, (8, 16, 128, 128), dtype=jnp.float32)
    y2 = jax.jit(hedy_forward)(x2)
    jax.block_until_ready(y2)
    assert y2.shape == x2.shape and y2.dtype == x2.dtype
    assert jnp.allclose(y2, jax.nn.sigmoid(x2), atol=1e-5, rtol=1e-5)

    # bf16 path (output dtype preserved; kernel computes in f32 internally).
    x3 = jax.random.normal(k0, (4, 8, 64, 128), dtype=jnp.bfloat16)
    y3 = jax.jit(hedy_forward)(x3)
    jax.block_until_ready(y3)
    assert y3.shape == x3.shape and y3.dtype == jnp.bfloat16
    assert jnp.allclose(
        y3.astype(jnp.float32),
        jax.nn.sigmoid(x3.astype(jnp.float32)),
        atol=2e-2, rtol=2e-2,
    )

    print("KERNEL_OK")
</pallas_src>

<mosaic_0001>
module attributes {stable_mosaic.version = 11 : i64} {
  func.func @_sigmoid_kernel(%arg0: i32, %arg1: memref<1x2048xf32, #tpu.memory_space<vmem>>, %arg2: memref<1x2048xf32, #tpu.memory_space<vmem>>) attributes {dimension_semantics = [#tpu.dimension_semantics<parallel>], iteration_bounds = array<i64: 1>, scalar_prefetch = 0 : i64, scratch_operands = 0 : i64, tpu.core_type = #tpu.core_type<tc>, window_params = [{transform_indices = @transform_0, window_bounds = array<i64: 1, 2048>}, {transform_indices = @transform_1, window_bounds = array<i64: 1, 2048>}]} {
    %c0 = arith.constant 0 : index
    %c0_0 = arith.constant 0 : index
    %0 = vector.load %arg1[%c0, %c0_0] : memref<1x2048xf32, #tpu.memory_space<vmem>>, vector<1x2048xf32>
    %cst = arith.constant 5.000000e-01 : f32
    %1 = vector.broadcast %cst : f32 to vector<1x2048xf32>
    %2 = arith.mulf %1, %0 : vector<1x2048xf32>
    %3 = math.tanh %2 : vector<1x2048xf32>
    %cst_1 = arith.constant 5.000000e-01 : f32
    %4 = vector.broadcast %cst_1 : f32 to vector<1x2048xf32>
    %5 = arith.mulf %4, %3 : vector<1x2048xf32>
    %cst_2 = arith.constant 5.000000e-01 : f32
    %6 = vector.broadcast %cst_2 : f32 to vector<1x2048xf32>
    %7 = arith.addf %5, %6 : vector<1x2048xf32>
    %c0_3 = arith.constant 0 : index
    %c0_4 = arith.constant 0 : index
    %8 = vector.load %arg2[%c0_3, %c0_4] : memref<1x2048xf32, #tpu.memory_space<vmem>>, vector<1x2048xf32>
    tpu.vector_store %arg2[%c0_3, %c0_4], %7 {strides = array<i32>} : memref<1x2048xf32, #tpu.memory_space<vmem>>, vector<1x2048xf32>,
    return
  }
  func.func @transform_0(%arg0: i32) -> (i32, i32) {
    %c0_i32 = arith.constant 0 : i32
    %c0_i32_0 = arith.constant 0 : i32
    return %arg0, %c0_i32 : i32, i32
  }
  func.func @transform_1(%arg0: i32) -> (i32, i32) {
    %c0_i32 = arith.constant 0 : i32
    %c0_i32_0 = arith.constant 0 : i32
    return %arg0, %c0_i32 : i32, i32
  }
}

</mosaic_0001>

<llo_original>
// kernel: tpu_custom_call.1
$region0: #{tpu_custom_call.1}
  #allocation0 [shape = 'u32[]', space=smem, size = 0x4, offset = 0x4, fixed_abs, tag = 'smem constant byte address 0x4 - core index']
  #allocation1 [shape = 'u32[144,128]{1,0:T(1,128)}', space=vmem, size = 0x12000, scoped, tag = 'internal scratch']
  %s0 = inlined_call_operand.hbm [shape: f32[1,2048], index: 0, kind: input, shape index: {}]
  %s1 = inlined_call_operand.hbm [shape: f32[1,2048], index: 1, kind: output, shape index: {}]
  %s2 = sld [smem:[#allocation0]]
  $region18: #{tpu_custom_call.1} parent=0
    _
  %s4 = ssub.s32 1, %s2
  %s5 = scalar_select 0, %s4, %s2
  $region1: #{tpu_custom_call.1} parent=0
    #allocation2 [shape = 'u8[8192]{0}', space=vmem, size = 0x2000, scoped, tag = 'input window, operand 0, single buffered']
    #allocation3 [shape = 's32[1]{0}', space=sflag, size = 0x4, scoped, tag = 'scoped memory for tpu_custom_call.1']
    #allocation4 [shape = 's32[1]{0}', space=sflag, size = 0x4, scoped, tag = 'scoped memory for tpu_custom_call.1']
    #allocation5 [shape = 'u8[8192]{0}', space=vmem, size = 0x2000, scoped, tag = 'output window, operand 0, single buffered']
    %6 = vsyncpa [#allocation3], 0
    %7 = vsyncpa [#allocation4], 0
    // Predicated region
    $region2: #{tpu_custom_call.1} parent=1 // pred_check
      _
    $region3: #{tpu_custom_call.1} parent=1 // pred_check_branch
      %9 = sbr.rel (0) target = $region5
    $region4: #{tpu_custom_call.1} parent=1 // pred_region
      %s11 = ssub.s32 256, 256
      %12 = vsyncadd [#allocation3], %s11
      %s14 = sshll.u32 [#allocation2], 4
      %s15 = int_to_ptr.vmem [resolvable:$true] %s14
      %17 = dma.hbm_to_vmem [thread:$0]  %s0, 256, %s15, [#allocation3]
    $region5: #{tpu_custom_call.1} parent=1 // pred_fallthru
      _
    // Predicated region
    $region6: #{tpu_custom_call.1} parent=1 // pred_check
      _
    $region7: #{tpu_custom_call.1} parent=1 // pred_check_branch
      %19 = sbr.rel (0) target = $region9
    $region8: #{tpu_custom_call.1} parent=1 // pred_region
      %20 = dma.done [#allocation3], 256
    $region9: #{tpu_custom_call.1} parent=1 // pred_fallthru
      _
    %v21 = vld [vmem:[#allocation2] sm:$0xff]
    %v22 = vld [vmem:[#allocation2 + $0x8] sm:$0xff]
    %v23 = vmul.f32 %v21, 0.5
    %v24 = vmul.f32 %v22, 0.5
    %v25 = vtanh.pop %v23
    %v26 = vtanh.pop %v24
    %v27 = vmul.f32 %v25, 0.5
    %v28 = vmul.f32 %v26, 0.5
    %v29 = vadd.f32 %v27, 0.5
    %v30 = vadd.f32 %v28, 0.5
    %31 = vst [vmem:[#allocation5] sm:$0xff] %v29
    %32 = vst [vmem:[#allocation5 + $0x8] sm:$0xff] %v30
    // Predicated region
    $region10: #{tpu_custom_call.1} parent=1 // pred_check
      _
    $region11: #{tpu_custom_call.1} parent=1 // pred_check_branch
      %34 = sbr.rel (0) target = $region13
    $region12: #{tpu_custom_call.1} parent=1 // pred_region
      %s36 = ssub.s32 256, 256
      %37 = vsyncadd [#allocation4], %s36
      %s39 = sshll.u32 [#allocation5], 4
      %s40 = int_to_ptr.vmem [resolvable:$true] %s39
      %42 = dma.vmem_to_hbm [thread:$0]  %s40, 256, %s1, [#allocation4]
    $region13: #{tpu_custom_call.1} parent=1 // pred_fallthru
      _
    // Predicated region
    $region14: #{tpu_custom_call.1} parent=1 // pred_check
      _
    $region15: #{tpu_custom_call.1} parent=1 // pred_check_branch
      %44 = sbr.rel (0) target = $region17
    $region16: #{tpu_custom_call.1} parent=1 // pred_region
      %45 = dma.done [#allocation4], 256
    $region17: #{tpu_custom_call.1} parent=1 // pred_fallthru
      _
    %46 = vsyncpa [#allocation3], 1
    %47 = vsyncpa [#allocation4], 1

</llo_original>
